<compile_context>
chip_gen: v5e
topology: v5e:2x2
jax: 0.10.0
libtpu: 0.0.40
codegen_flags: <defaults>
</compile_context>

<pallas_src>
import numpy as np

import jax
import jax.numpy as jnp
from jax.experimental import pallas as pl
from jax.experimental.pallas import tpu as pltpu


# ---------------------------------------------------------------------------
# Kernels
# ---------------------------------------------------------------------------
def mlp_resident_kernel(x_ref, w1_ref, b1_ref, w2_ref, b2_ref, o_ref):
    """Whole MLP for one row tile; W1/W2 fully resident in VMEM."""
    # fc1: bf16 x bf16 -> f32 accumulation on the MXU; bias + ReLU on the VPU.
    h = jnp.dot(x_ref[...], w1_ref[...], preferred_element_type=jnp.float32)
    h = jnp.maximum(h + b1_ref[...], 0.0)
    # fc2: cast activations to the MXU dtype, f32 accumulation, f32 bias add.
    y = jnp.dot(h.astype(w2_ref.dtype), w2_ref[...],
                preferred_element_type=jnp.float32)
    o_ref[...] = (y + b2_ref[...]).astype(o_ref.dtype)


def mlp_streamed_kernel(x_ref, w1_ref, b1_ref, w2_ref, b2_ref, o_ref, h_ref):
    """W2 streamed over an innermost D_out axis; fc1 computed once per row
    tile (under j == 0) into VMEM scratch and reused for every W2 slab."""
    @pl.when(pl.program_id(1) == 0)
    def _():
        h = jnp.dot(x_ref[...], w1_ref[...],
                    preferred_element_type=jnp.float32)
        h_ref[...] = jnp.maximum(h + b1_ref[...], 0.0).astype(h_ref.dtype)

    y = jnp.dot(h_ref[...], w2_ref[...], preferred_element_type=jnp.float32)
    o_ref[...] = (y + b2_ref[...]).astype(o_ref.dtype)


# ---------------------------------------------------------------------------
# Helpers
# ---------------------------------------------------------------------------
def _supports_single_buffering():
    """Construction-time probe: does this jax accept pipeline_mode=Buffered(1)?"""
    try:
        pl.BlockSpec((8, 128), lambda i: (i, 0), pipeline_mode=pl.Buffered(1))
        return True
    except (AttributeError, TypeError, ValueError):
        return False


def _vmem_capacity_bytes():
    try:
        return int(pltpu.get_tpu_info().vmem_capacity_bytes)
    except Exception:  # best-effort hardware query only
        return 64 * 1024 * 1024  # conservative: v7x per-TensorCore VMEM


def _pick_tn(d_out, tn_max):
    """Largest multiple-of-128 divisor of d_out that is <= tn_max (or None)."""
    best = None
    t = 128
    while t <= min(tn_max, d_out):
        if d_out % t == 0:
            best = t
        t += 128
    return best


def _spec(shape, index_map, *, single_buffer):
    # Grid-invariant operands: a single VMEM buffer is enough (halves their
    # footprint -- the v7x requirement); otherwise use default double-buffering.
    if single_buffer:
        return pl.BlockSpec(shape, index_map, pipeline_mode=pl.Buffered(1))
    return pl.BlockSpec(shape, index_map)


def _resident_call(M_pad, D_in, H, D_out, tm, out_dtype, *,
                   single_buffer_weights, vmem_limit_bytes):
    grid = (M_pad // tm,)
    return pl.pallas_call(
        mlp_resident_kernel,
        out_shape=jax.ShapeDtypeStruct((M_pad, D_out), out_dtype),
        grid_spec=pltpu.PrefetchScalarGridSpec(
            num_scalar_prefetch=0,
            grid=grid,
            in_specs=[
                pl.BlockSpec((tm, D_in), lambda i: (i, 0)),                # x
                _spec((D_in, H), lambda i: (0, 0),
                      single_buffer=single_buffer_weights),                # W1
                _spec((1, H), lambda i: (0, 0),
                      single_buffer=single_buffer_weights),                # b1
                _spec((H, D_out), lambda i: (0, 0),
                      single_buffer=single_buffer_weights),                # W2
                _spec((1, D_out), lambda i: (0, 0),
                      single_buffer=single_buffer_weights),                # b2
            ],
            out_specs=pl.BlockSpec((tm, D_out), lambda i: (i, 0)),
        ),
        compiler_params=pltpu.CompilerParams(
            dimension_semantics=("parallel",),
            vmem_limit_bytes=vmem_limit_bytes,
        ),
    )


def _streamed_call(M_pad, D_in, H, D_out, tm, tn, out_dtype, compute_dtype, *,
                   single_buffer_weights, vmem_limit_bytes):
    # j (D_out slabs) is the innermost axis so the h-cache scratch is valid.
    grid = (M_pad // tm, D_out // tn)
    return pl.pallas_call(
        mlp_streamed_kernel,
        out_shape=jax.ShapeDtypeStruct((M_pad, D_out), out_dtype),
        grid_spec=pltpu.PrefetchScalarGridSpec(
            num_scalar_prefetch=0,
            grid=grid,
            in_specs=[
                pl.BlockSpec((tm, D_in), lambda i, j: (i, 0)),             # x
                _spec((D_in, H), lambda i, j: (0, 0),
                      single_buffer=single_buffer_weights),                # W1
                _spec((1, H), lambda i, j: (0, 0),
                      single_buffer=single_buffer_weights),                # b1
                pl.BlockSpec((H, tn), lambda i, j: (0, j)),                # W2 slab
                pl.BlockSpec((1, tn), lambda i, j: (0, j)),                # b2 slab
            ],
            out_specs=pl.BlockSpec((tm, tn), lambda i, j: (i, j)),
            scratch_shapes=[pltpu.VMEM((tm, H), compute_dtype)],           # h cache
        ),
        compiler_params=pltpu.CompilerParams(
            # j carries the h-cache across iterations -> MUST be "arbitrary";
            # the row axis stays "parallel" for the v7x megacore.
            dimension_semantics=("parallel", "arbitrary"),
            vmem_limit_bytes=vmem_limit_bytes,
        ),
    )


# ---------------------------------------------------------------------------
# Wrapper
# ---------------------------------------------------------------------------
def ezsr_projector(x, w1, b1, w2, b2, *, tm=None, tn_max=1024,
                   compute_dtype=jnp.bfloat16, out_dtype=jnp.float32,
                   vmem_limit_bytes=None):
    """x: [M, D_in]; w1: [D_in, H]; b1: [H]; w2: [H, D_out]; b2: [D_out]."""
    M, D_in = x.shape
    H = w1.shape[1]
    D_out = w2.shape[1]

    vmem_cap = _vmem_capacity_bytes()
    if vmem_limit_bytes is None:
        # ~25% headroom for compiler-internal scratch:
        # ~48 MiB on v7x (64 MiB/TC), ~96 MiB on v5e/v6e (128 MiB).
        vmem_limit_bytes = min(int(vmem_cap * 0.75), 100 * 1024 * 1024)
    if tm is None:
        # Bigger row tiles where VMEM is plentiful (v5e/v6e); 256 on v7x.
        tm = 512 if vmem_limit_bytes >= 80 * 1024 * 1024 else 256

    # bf16 inputs for the MXU; biases stay f32 and are added post-accumulation.
    # TODO(synk): optional fp8 weight quantization for the v7x MXU fp8 path.
    xc = x.astype(compute_dtype)
    w1c = w1.astype(compute_dtype)
    w2c = w2.astype(compute_dtype)
    b1f = jnp.asarray(b1, jnp.float32).reshape(1, H)
    b2f = jnp.asarray(b2, jnp.float32).reshape(1, D_out)

    # Row tile: cap at M; if M would otherwise collapse to one big tile, split
    # it so the "parallel" row axis gives both v7x TensorCores work.
    tm = min(tm, M)
    if M >= 256 and tm == M:
        tm = pl.cdiv(pl.cdiv(M, 2), 8) * 8
    M_pad = pl.cdiv(M, tm) * tm
    if M_pad != M:
        # Pad only when the final row tile is ragged, after the bf16 cast
        # (narrow dtype); padded rows are sliced off below.
        xc = jnp.pad(xc, ((0, M_pad - M), (0, 0)))

    single_buffer = _supports_single_buffering()

    # Residency decision: keep W1/W2 in VMEM for the whole call whenever their
    # buffered footprint plus the x/out pipeline buffers fits the budget.
    wbytes = np.dtype(compute_dtype).itemsize
    obytes = np.dtype(out_dtype).itemsize
    weight_bytes = (D_in * H + H * D_out) * wbytes * (1 if single_buffer else 2)
    act_bytes = 2 * tm * (D_in * wbytes + D_out * obytes)
    resident_ok = weight_bytes + act_bytes <= int(0.75 * vmem_limit_bytes)

    tn = None
    if not resident_ok:
        tn = _pick_tn(D_out, tn_max)
        if tn is None:
            # TODO(synk): pad D_out to a multiple of 128 for streaming; for now
            # fall back to the resident path (may exceed the VMEM budget).
            resident_ok = True

    args = (xc, w1c, b1f, w2c, b2f)

    def _run(single_buf):
        if resident_ok:
            call = _resident_call(M_pad, D_in, H, D_out, tm, out_dtype,
                                  single_buffer_weights=single_buf,
                                  vmem_limit_bytes=vmem_limit_bytes)
        else:
            call = _streamed_call(M_pad, D_in, H, D_out, tm, tn, out_dtype,
                                  compute_dtype,
                                  single_buffer_weights=single_buf,
                                  vmem_limit_bytes=vmem_limit_bytes)
        return call(*args)

    try:
        out = _run(single_buffer)
    except (pltpu.LoweringException, NotImplementedError):
        # Narrow fallback: jax accepted pipeline_mode=Buffered(1) at BlockSpec
        # construction but the TPU lowering rejected it.  Any other failure
        # (e.g. VMEM OOM) propagates instead of being masked.
        if not single_buffer:
            raise
        out = _run(False)

    return out[:M] if M_pad != M else out


def init_linear_params(kw, kb, fan_in, fan_out):
    """PyTorch-style nn.Linear init: U(-1/sqrt(fan_in), 1/sqrt(fan_in)).

    Weight returned transposed: [fan_in, fan_out]."""
    bound = 1.0 / float(fan_in) ** 0.5
    w = jax.random.uniform(kw, (fan_in, fan_out), jnp.float32, -bound, bound)
    b = jax.random.uniform(kb, (fan_out,), jnp.float32, -bound, bound)
    return w, b


if __name__ == "__main__":
    # Small shapes consistent with the module's MLP structure
    # (real module: input_dim=1024, hidden_dim=2048, output_dim=4096).
    batch, seq = 2, 8
    input_dim, hidden_dim, output_dim = 32, 64, 128

    key = jax.random.PRNGKey(0)
    kx, k1w, k1b, k2w, k2b = jax.random.split(key, 5)

    x = jax.random.normal(kx, (batch, seq, input_dim), jnp.float32)
    w1, b1 = init_linear_params(k1w, k1b, input_dim, hidden_dim)
    w2, b2 = init_linear_params(k2w, k2b, hidden_dim, output_dim)

    # Flatten leading dims -> [M, input_dim]; the kernel works on 2-D rows.
    x2d = x.reshape(batch * seq, input_dim)
    out2d = ezsr_projector(x2d, w1, b1, w2, b2)
    out = out2d.reshape(batch, seq, output_dim)
    jax.block_until_ready(out)

    # Reference mirroring the kernel's bf16-input / f32-accumulate numerics.
    xb = x2d.astype(jnp.bfloat16).astype(jnp.float32)
    w1b = w1.astype(jnp.bfloat16).astype(jnp.float32)
    w2b = w2.astype(jnp.bfloat16).astype(jnp.float32)
    h_ref = jnp.maximum(xb @ w1b + b1[None, :], 0.0)
    h_ref = h_ref.astype(jnp.bfloat16).astype(jnp.float32)
    ref = h_ref @ w2b + b2[None, :]
    assert jnp.allclose(out2d, ref, atol=1e-3, rtol=1e-2), "mismatch vs bf16 reference"

    # Sanity vs. the full-f32 PyTorch-equivalent math (looser: bf16 rounding).
    ref_f32 = jnp.maximum(x2d @ w1 + b1[None, :], 0.0) @ w2 + b2[None, :]
    assert jnp.allclose(out2d, ref_f32, atol=5e-2, rtol=5e-2), "bf16 drift too large"

    print("KERNEL_OK")
</pallas_src>

<mosaic_0001>
module attributes {stable_mosaic.version = 11 : i64} {
  func.func @mlp_resident_kernel(%arg0: i32, %arg1: memref<16x32xbf16, #tpu.memory_space<vmem>>, %arg2: memref<32x64xbf16, #tpu.memory_space<vmem>>, %arg3: memref<1x64xf32, #tpu.memory_space<vmem>>, %arg4: memref<64x128xbf16, #tpu.memory_space<vmem>>, %arg5: memref<1x128xf32, #tpu.memory_space<vmem>>, %arg6: memref<16x128xf32, #tpu.memory_space<vmem>>) attributes {dimension_semantics = [#tpu.dimension_semantics<parallel>], iteration_bounds = array<i64: 1>, scalar_prefetch = 0 : i64, scratch_operands = 0 : i64, tpu.core_type = #tpu.core_type<tc>, window_params = [{transform_indices = @transform_0, window_bounds = array<i64: 16, 32>}, {pipeline_mode = #tpu.pipeline_mode<synchronous>, transform_indices = @transform_1, window_bounds = array<i64: 32, 64>}, {pipeline_mode = #tpu.pipeline_mode<synchronous>, transform_indices = @transform_2, window_bounds = array<i64: 1, 64>}, {pipeline_mode = #tpu.pipeline_mode<synchronous>, transform_indices = @transform_3, window_bounds = array<i64: 64, 128>}, {pipeline_mode = #tpu.pipeline_mode<synchronous>, transform_indices = @transform_4, window_bounds = array<i64: 1, 128>}, {transform_indices = @transform_5, window_bounds = array<i64: 16, 128>}]} {
    %c0 = arith.constant 0 : index
    %c0_0 = arith.constant 0 : index
    %0 = vector.load %arg1[%c0, %c0_0] : memref<16x32xbf16, #tpu.memory_space<vmem>>, vector<16x32xbf16>
    %c0_1 = arith.constant 0 : index
    %c0_2 = arith.constant 0 : index
    %1 = vector.load %arg2[%c0_1, %c0_2] : memref<32x64xbf16, #tpu.memory_space<vmem>>, vector<32x64xbf16>
    %cst = arith.constant dense<0.000000e+00> : vector<16x64xf32>
    %2 = tpu.matmul %0, %1, %cst {dimension_numbers = #tpu.dot_dimension_numbers<[1], [0], [0], [1], [0, 0, 1, 1], [], []>} : vector<16x32xbf16>, vector<32x64xbf16>, vector<16x64xf32> -> vector<16x64xf32>
    %c0_3 = arith.constant 0 : index
    %c0_4 = arith.constant 0 : index
    %3 = vector.load %arg3[%c0_3, %c0_4] : memref<1x64xf32, #tpu.memory_space<vmem>>, vector<1x64xf32>
    %4 = vector.broadcast %3 : vector<1x64xf32> to vector<16x64xf32>
    %5 = arith.addf %2, %4 : vector<16x64xf32>
    %cst_5 = arith.constant 0.000000e+00 : f32
    %6 = vector.broadcast %cst_5 : f32 to vector<16x64xf32>
    %7 = arith.maximumf %5, %6 : vector<16x64xf32>
    %8 = arith.truncf %7 : vector<16x64xf32> to vector<16x64xbf16>
    %c0_6 = arith.constant 0 : index
    %c0_7 = arith.constant 0 : index
    %9 = vector.load %arg4[%c0_6, %c0_7] : memref<64x128xbf16, #tpu.memory_space<vmem>>, vector<64x128xbf16>
    %cst_8 = arith.constant dense<0.000000e+00> : vector<16x128xf32>
    %10 = tpu.matmul %8, %9, %cst_8 {dimension_numbers = #tpu.dot_dimension_numbers<[1], [0], [0], [1], [0, 0, 1, 1], [], []>} : vector<16x64xbf16>, vector<64x128xbf16>, vector<16x128xf32> -> vector<16x128xf32>
    %c0_9 = arith.constant 0 : index
    %c0_10 = arith.constant 0 : index
    %11 = vector.load %arg5[%c0_9, %c0_10] : memref<1x128xf32, #tpu.memory_space<vmem>>, vector<1x128xf32>
    %12 = vector.broadcast %11 : vector<1x128xf32> to vector<16x128xf32>
    %13 = arith.addf %10, %12 : vector<16x128xf32>
    %c0_11 = arith.constant 0 : index
    %c0_12 = arith.constant 0 : index
    %14 = vector.load %arg6[%c0_11, %c0_12] : memref<16x128xf32, #tpu.memory_space<vmem>>, vector<16x128xf32>
    tpu.vector_store %arg6[%c0_11, %c0_12], %13 {strides = array<i32>} : memref<16x128xf32, #tpu.memory_space<vmem>>, vector<16x128xf32>,
    return
  }
  func.func @transform_0(%arg0: i32) -> (i32, i32) {
    %c0_i32 = arith.constant 0 : i32
    %c0_i32_0 = arith.constant 0 : i32
    return %arg0, %c0_i32 : i32, i32
  }
  func.func @transform_1(%arg0: i32) -> (i32, i32) {
    %c0_i32 = arith.constant 0 : i32
    %c0_i32_0 = arith.constant 0 : i32
    %c0_i32_1 = arith.constant 0 : i32
    return %c0_i32, %c0_i32_0 : i32, i32
  }
  func.func @transform_2(%arg0: i32) -> (i32, i32) {
    %c0_i32 = arith.constant 0 : i32
    %c0_i32_0 = arith.constant 0 : i32
    %c0_i32_1 = arith.constant 0 : i32
    return %c0_i32, %c0_i32_0 : i32, i32
  }
  func.func @transform_3(%arg0: i32) -> (i32, i32) {
    %c0_i32 = arith.constant 0 : i32
    %c0_i32_0 = arith.constant 0 : i32
    %c0_i32_1 = arith.constant 0 : i32
    return %c0_i32, %c0_i32_0 : i32, i32
  }
  func.func @transform_4(%arg0: i32) -> (i32, i32) {
    %c0_i32 = arith.constant 0 : i32
    %c0_i32_0 = arith.constant 0 : i32
    %c0_i32_1 = arith.constant 0 : i32
    return %c0_i32, %c0_i32_0 : i32, i32
  }
  func.func @transform_5(%arg0: i32) -> (i32, i32) {
    %c0_i32 = arith.constant 0 : i32
    %c0_i32_0 = arith.constant 0 : i32
    return %arg0, %c0_i32 : i32, i32
  }
}

</mosaic_0001>

<llo_original>
// kernel: tpu_custom_call.1
$region0: #{tpu_custom_call.1}
  #allocation0 [shape = 'u32[]', space=smem, size = 0x4, offset = 0x4, fixed_abs, tag = 'smem constant byte address 0x4 - core index']
  #allocation1 [shape = 'u32[72,128]{1,0:T(1,128)}', space=vmem, size = 0x9000, scoped, tag = 'internal scratch']
  %s0 = inlined_call_operand.hbm [shape: bf16[16,32], index: 0, kind: input, shape index: {}]
  %s1 = inlined_call_operand.hbm [shape: bf16[32,64], index: 1, kind: input, shape index: {}]
  %s2 = inlined_call_operand.vmem [shape: f32[1,64], index: 2, kind: input, shape index: {}]
  %s3 = inlined_call_operand.hbm [shape: bf16[64,128], index: 3, kind: input, shape index: {}]
  %s4 = inlined_call_operand.vmem [shape: f32[1,128], index: 4, kind: input, shape index: {}]
  %s5 = inlined_call_operand.hbm [shape: f32[16,128], index: 5, kind: output, shape index: {}]
  %s6 = sld [smem:[#allocation0]]
  $region42: #{tpu_custom_call.1} parent=0
    _
  %s8 = ssub.s32 1, %s6
  %s9 = scalar_select 0, %s8, %s6
  $region1: #{tpu_custom_call.1} parent=0
    #allocation2 [shape = 'u8[4096]{0}', space=vmem, size = 0x1000, scoped, tag = 'input window, operand 0, single buffered']
    #allocation3 [shape = 's32[1]{0}', space=sflag, size = 0x4, scoped, tag = 'scoped memory for tpu_custom_call.1']
    #allocation4 [shape = 's32[1]{0}', space=sflag, size = 0x4, scoped, tag = 'scoped memory for tpu_custom_call.1']
    #allocation5 [shape = 'u8[8192]{0}', space=vmem, size = 0x2000, scoped, tag = 'input window, operand 1, single buffered']
    #allocation6 [shape = 's32[1]{0}', space=sflag, size = 0x4, scoped, tag = 'scoped memory for tpu_custom_call.1']
    #allocation7 [shape = 'u8[16384]{0}', space=vmem, size = 0x4000, scoped, tag = 'input window, operand 3, single buffered']
    #allocation8 [shape = 'u8[8192]{0}', space=vmem, size = 0x2000, scoped, tag = 'output window, operand 0, single buffered']
    %10 = vsyncpa [#allocation3], 0
    %11 = vsyncpa [#allocation6], 0
    %12 = vsyncpa [#allocation4], 0
    // Predicated region
    $region2: #{tpu_custom_call.1} parent=1 // pred_check
      _
    $region3: #{tpu_custom_call.1} parent=1 // pred_check_branch
      %14 = sbr.rel (0) target = $region5
    $region4: #{tpu_custom_call.1} parent=1 // pred_region
      %16 = vsyncadd [#allocation3], 0
      %s17 = sshll.u32 %s0, 4
      %s18 = int_to_ptr.hbm [resolvable:$true] %s17
      %s19 = sshll.u32 [#allocation2], 4
      %s20 = int_to_ptr.vmem [resolvable:$true] %s19
      %25 = dma.hbm_to_vmem [thread:$0]  %s18, 128, %s20, [#allocation3], 64, 64, 4
    $region5: #{tpu_custom_call.1} parent=1 // pred_fallthru
      _
    // Predicated region
    $region6: #{tpu_custom_call.1} parent=1 // pred_check
      _
    $region7: #{tpu_custom_call.1} parent=1 // pred_check_branch
      %27 = sbr.rel (0) target = $region9
    $region8: #{tpu_custom_call.1} parent=1 // pred_region
      %29 = vsyncadd [#allocation6], 0
      %s30 = sshll.u32 %s1, 4
      %s31 = int_to_ptr.hbm [resolvable:$true] %s30
      %s32 = sshll.u32 [#allocation5], 4
      %s33 = int_to_ptr.vmem [resolvable:$true] %s32
      %38 = dma.hbm_to_vmem [thread:$0]  %s31, 256, %s33, [#allocation6], 64, 64, 4
    $region9: #{tpu_custom_call.1} parent=1 // pred_fallthru
      _
    // Predicated region
    $region10: #{tpu_custom_call.1} parent=1 // pred_check
      _
    $region11: #{tpu_custom_call.1} parent=1 // pred_check_branch
      %40 = sbr.rel (0) target = $region13
    $region12: #{tpu_custom_call.1} parent=1 // pred_region
      _
    $region13: #{tpu_custom_call.1} parent=1 // pred_fallthru
      _
    // Predicated region
    $region14: #{tpu_custom_call.1} parent=1 // pred_check
      _
    $region15: #{tpu_custom_call.1} parent=1 // pred_check_branch
      %42 = sbr.rel (0) target = $region17
    $region16: #{tpu_custom_call.1} parent=1 // pred_region
      %44 = vsyncadd [#allocation6], 0
      %s45 = sshll.u32 %s3, 4
      %s46 = int_to_ptr.hbm [resolvable:$true] %s45
      %s47 = sshll.u32 [#allocation7], 4
      %s48 = int_to_ptr.vmem [resolvable:$true] %s47
      %53 = dma.hbm_to_vmem [thread:$0]  %s46, 512, %s48, [#allocation6], 64, 64, 4
    $region17: #{tpu_custom_call.1} parent=1 // pred_fallthru
      _
    // Predicated region
    $region18: #{tpu_custom_call.1} parent=1 // pred_check
      _
    $region19: #{tpu_custom_call.1} parent=1 // pred_check_branch
      %55 = sbr.rel (0) target = $region21
    $region20: #{tpu_custom_call.1} parent=1 // pred_region
      _
    $region21: #{tpu_custom_call.1} parent=1 // pred_fallthru
      _
    // Predicated region
    $region22: #{tpu_custom_call.1} parent=1 // pred_check
      _
    $region23: #{tpu_custom_call.1} parent=1 // pred_check_branch
      %57 = sbr.rel (0) target = $region25
    $region24: #{tpu_custom_call.1} parent=1 // pred_region
      %59 = dma.done [#allocation3], 128
    $region25: #{tpu_custom_call.1} parent=1 // pred_fallthru
      _
    // Predicated region
    $region26: #{tpu_custom_call.1} parent=1 // pred_check
      _
    $region27: #{tpu_custom_call.1} parent=1 // pred_check_branch
      %61 = sbr.rel (0) target = $region29
    $region28: #{tpu_custom_call.1} parent=1 // pred_region
      %63 = dma.done [#allocation6], 256
    $region29: #{tpu_custom_call.1} parent=1 // pred_fallthru
      _
    // Predicated region
    $region30: #{tpu_custom_call.1} parent=1 // pred_check
      _
    $region31: #{tpu_custom_call.1} parent=1 // pred_check_branch
      %65 = sbr.rel (0) target = $region33
    $region32: #{tpu_custom_call.1} parent=1 // pred_region
      %67 = dma.done [#allocation6], 512
    $region33: #{tpu_custom_call.1} parent=1 // pred_fallthru
      _
    %v69 = vld [vmem:[#allocation2] sm:$0xf]
    %v70 = vld [vmem:[#allocation2 + $0x4] sm:$0xf]
    %v71 = vld [vmem:[#allocation5] sm:$0xf]
    %v72 = vld [vmem:[#allocation5 + $0x4] sm:$0xf]
    %v73 = vld [vmem:[#allocation5 + $0x8] sm:$0xf]
    %v74 = vld [vmem:[#allocation5 + $0xc] sm:$0xf]
    %v75 = vld [vmem:[%s2] sm:$0x1]
    %v77 = vperm.slane %v75, 0
    %v81 = vunpack.c.l.b16 %v69
    %v82 = vunpack.c.l.b16 %v70
    %v83 = vpack.c.b16 %v82, %v81
    %v88 = vunpack.c.l.b16 %v71
    %v89 = vunpack.c.l.b16 %v72
    %v90 = vunpack.c.l.b16 %v73
    %v91 = vunpack.c.l.b16 %v74
    %v92 = vpack.c.b16 %v89, %v88
    %v93 = vpack.c.b16 %v91, %v90
    %vm96 = vcmask 261120
    %v98 = vsel %vm96, %v83, 0
    %100 = vmatpush.bf16.msra.mxu0 0
    %101 = vmatpush.bf16.msra.mxu0 0
    %102 = vmatpush.bf16.msra.mxu0 0
    %103 = vmatpush.bf16.msra.mxu0 0
    %104 = vmatpush.bf16.msra.mxu0 0
    %105 = vmatpush.bf16.msra.mxu0 0
    %106 = vmatpush.bf16.msra.mxu0 %v93
    %107 = vmatpush.bf16.msra.mxu0 %v92
    %108 = vmatmul.bf16.gmra.mxu0 %v98
    %v109 = vpop.f32.mrf.mxu0
    %v110 = vadd.f32 %v77, %v109
    %v111 = vpop.f32.mrf.mxu0
    %v112 = vadd.f32 %v77, %v111
    %113 = vdwg.mxu0
    %v114 = vmax.f32 %v110, 0.0
    %v115 = vmax.f32 %v112, 0.0
    %v116 = vpack.c.bf16 %v115, %v114
    %v117 = vld [vmem:[#allocation7] sm:$0xf]
    %v118 = vld [vmem:[#allocation7 + $0x4] sm:$0xf]
    %v119 = vld [vmem:[#allocation7 + $0x8] sm:$0xf]
    %v120 = vld [vmem:[#allocation7 + $0xc] sm:$0xf]
    %v121 = vld [vmem:[#allocation7 + $0x10] sm:$0xf]
    %v122 = vld [vmem:[#allocation7 + $0x14] sm:$0xf]
    %v123 = vld [vmem:[#allocation7 + $0x18] sm:$0xf]
    %v124 = vld [vmem:[#allocation7 + $0x1c] sm:$0xf]
    %v125 = vld [vmem:[%s4] sm:$0x1]
    %v127 = vperm.slane %v125, 0
    %v137 = vunpack.c.l.b16 %v117
    %v138 = vunpack.c.l.b16 %v118
    %v139 = vunpack.c.l.b16 %v119
    %v140 = vunpack.c.l.b16 %v120
    %v141 = vunpack.c.l.b16 %v121
    %v142 = vunpack.c.l.b16 %v122
    %v143 = vunpack.c.l.b16 %v123
    %v144 = vunpack.c.l.b16 %v124
    %v145 = vpack.c.b16 %v138, %v137
    %v146 = vpack.c.b16 %v140, %v139
    %v147 = vpack.c.b16 %v142, %v141
    %v148 = vpack.c.b16 %v144, %v143
    %vm153 = vcmask 523264
    %v155 = vsel %vm153, %v116, 0
    %157 = vmatpush.bf16.msra.mxu0 0
    %158 = vmatpush.bf16.msra.mxu0 0
    %159 = vmatpush.bf16.msra.mxu0 0
    %160 = vmatpush.bf16.msra.mxu0 0
    %161 = vmatpush.bf16.msra.mxu0 %v148
    %162 = vmatpush.bf16.msra.mxu0 %v147
    %163 = vmatpush.bf16.msra.mxu0 %v146
    %164 = vmatpush.bf16.msra.mxu0 %v145
    %165 = vmatmul.bf16.gmra.mxu0 %v155
    %v166 = vpop.f32.mrf.mxu0
    %v167 = vadd.f32 %v127, %v166
    %v168 = vpop.f32.mrf.mxu0
    %v169 = vadd.f32 %v127, %v168
    %170 = vdwg.mxu0
    %171 = vst [vmem:[#allocation8] sm:$0xff] %v167
    %172 = vst [vmem:[#allocation8 + $0x8] sm:$0xff] %v169
    // Predicated region
    $region34: #{tpu_custom_call.1} parent=1 // pred_check
      _
    $region35: #{tpu_custom_call.1} parent=1 // pred_check_branch
      %174 = sbr.rel (0) target = $region37
    $region36: #{tpu_custom_call.1} parent=1 // pred_region
      %176 = vsyncadd [#allocation4], 0
      %s177 = sshll.u32 [#allocation8], 4
      %s178 = int_to_ptr.vmem [resolvable:$true] %s177
      %s179 = sshll.u32 %s5, 4
      %s180 = int_to_ptr.hbm [resolvable:$true] %s179
      %185 = dma.vmem_to_hbm [thread:$0]  %s178, 256, %s180, [#allocation4], 128, 128, 8
    $region37: #{tpu_custom_call.1} parent=1 // pred_fallthru
      _
    // Predicated region
    $region38: #{tpu_custom_call.1} parent=1 // pred_check
      _
    $region39: #{tpu_custom_call.1} parent=1 // pred_check_branch
      %187 = sbr.rel (0) target = $region41
    $region40: #{tpu_custom_call.1} parent=1 // pred_region
      %189 = dma.done [#allocation4], 256
    $region41: #{tpu_custom_call.1} parent=1 // pred_fallthru
      _
    %190 = vsyncpa [#allocation3], 1
    %191 = vsyncpa [#allocation6], 1
    %192 = vsyncpa [#allocation4], 1

</llo_original>
